<compile_context>
chip_gen: v5e
topology: v5e:2x2
jax: 0.10.0
libtpu: 0.0.40
codegen_flags: <defaults>
</compile_context>

<pallas_src>
import functools

import numpy as np
import jax
import jax.numpy as jnp
from jax.experimental import pallas as pl
from jax.experimental.pallas import tpu as pltpu

_SUBLANE = 8
_LANE = 128
_VMEM_LIMIT_BYTES = 32 * 1024 * 1024  # explicit, safe on v5e/v6e/v7x


def _ceil_to(x, m):
    return (x + m - 1) // m * m


def _pick_cout_tile(cout):
    if cout > 256 and cout % 256 == 0:
        return 256
    if cout > 128 and cout % 128 == 0:
        return 128
    return cout


# ----------------------------------------------------------------------------- kernels
def _dense_conv_kernel(x_ref, w_ref, o_ref, patches_ref, *, KH, KW, dil, Wp):
    """Dense conv (groups=1, stride=1) as a single fused-K MXU matmul.

    x_ref:       (1, Cp, P)   one image: channels x flattened padded spatial (lane axis)
    w_ref:       (TCo, KH*KW*Cp)  tap-major / channel-minor weight slab (Cout tile)
    o_ref:       (1, TCo, P)
    patches_ref: (KH*KW*Cp, P)  VMEM scratch holding the im2col slab
    """
    x = x_ref[0]                                   # (Cp, P)
    Cp, P = x.shape
    for kh in range(KH):
        for kw in range(KW):
            off = kh * dil * Wp + kw * dil         # flat-index shift of this tap
            tap = pltpu.roll(x, (-off) % P, axis=1) if off else x   # XLU lane rotate
            t = kh * KW + kw
            patches_ref[t * Cp:(t + 1) * Cp, :] = tap
    o_ref[0] = jnp.dot(w_ref[...], patches_ref[...],
                       preferred_element_type=jnp.float32).astype(o_ref.dtype)


def _depthwise_conv_kernel(x_ref, w_ref, o_ref, *, KH, KW, dil, Wp):
    """Depthwise conv (groups=C, multiplier 1, stride=1): VPU multiply-accumulate.

    x_ref: (1, Cp, P)      w_ref: (Cp, KH*KW)      o_ref: (1, Cp, P)
    """
    x = x_ref[0].astype(jnp.float32)               # (Cp, P)
    P = x.shape[-1]
    w = w_ref[...].astype(jnp.float32)             # (Cp, KH*KW)
    acc = jnp.zeros(x.shape, jnp.float32)
    for kh in range(KH):
        for kw in range(KW):
            off = kh * dil * Wp + kw * dil
            tap = pltpu.roll(x, (-off) % P, axis=1) if off else x
            t = kh * KW + kw
            acc = acc + tap * w[:, t:t + 1]        # (Cp,1) broadcasts over lanes
    o_ref[0] = acc.astype(o_ref.dtype)


def _dwsep_conv_kernel(x_ref, wdw_ref, wpw_ref, o_ref, *, KH, KW, dil, Wp):
    """Fused depthwise (VPU) + 1x1 pointwise (MXU) conv, no HBM intermediate.

    x_ref: (1, Cp, P)   wdw_ref: (Cp, KH*KW)   wpw_ref: (Cout, Cp)   o_ref: (1, Cout, P)
    """
    x = x_ref[0].astype(jnp.float32)
    P = x.shape[-1]
    wdw = wdw_ref[...].astype(jnp.float32)
    acc = jnp.zeros(x.shape, jnp.float32)
    for kh in range(KH):
        for kw in range(KW):
            off = kh * dil * Wp + kw * dil
            tap = pltpu.roll(x, (-off) % P, axis=1) if off else x
            t = kh * KW + kw
            acc = acc + tap * wdw[:, t:t + 1]
    o_ref[0] = jnp.dot(wpw_ref[...].astype(jnp.float32), acc,
                       preferred_element_type=jnp.float32).astype(o_ref.dtype)


# ----------------------------------------------------------------------------- layout helpers
def _pad_flatten_nchw(x, padding):
    """Conv zero-padding, channel pad to sublane multiple, flatten H*W onto lanes."""
    N, C, H, W = x.shape
    Hp, Wp = H + 2 * padding, W + 2 * padding
    Cp = _ceil_to(C, _SUBLANE)
    P = _ceil_to(Hp * Wp, _LANE)
    xf = jnp.pad(x, ((0, 0), (0, Cp - C), (padding, padding), (padding, padding)))
    xf = xf.reshape(N, Cp, Hp * Wp)
    if P != Hp * Wp:
        xf = jnp.pad(xf, ((0, 0), (0, 0), (0, P - Hp * Wp)))
    return xf, Cp, Hp, Wp, P


def _crop_output(out_flat, channels, Hp, Wp, Ho, Wo):
    """Drop padded channels / the padded spatial ring / the lane-rounding tail."""
    N = out_flat.shape[0]
    out = out_flat[:, :channels, :Hp * Wp].reshape(N, channels, Hp, Wp)
    return out[:, :, :Ho, :Wo]


# ----------------------------------------------------------------------------- wrappers
@functools.partial(jax.jit, static_argnames=("padding", "dilation"))
def conv2d_nchw(x, w_oihw, *, padding=0, dilation=1):
    """Dense 2D convolution (groups=1, stride=1, no bias) via Pallas."""
    N, Cin, H, W = x.shape
    Cout, Cin_w, KH, KW = w_oihw.shape
    assert Cin_w == Cin
    Ho = H + 2 * padding - dilation * (KH - 1)
    Wo = W + 2 * padding - dilation * (KW - 1)
    xf, Cp, Hp, Wp, P = _pad_flatten_nchw(x, padding)

    K = KH * KW * Cp
    # OIHW -> (Cout, KH, KW, Cp) -> (Cout, K): tap-major, channel-minor (matches kernel).
    w2 = jnp.pad(w_oihw, ((0, 0), (0, Cp - Cin), (0, 0), (0, 0)))
    w2 = jnp.transpose(w2, (0, 2, 3, 1)).reshape(Cout, K)

    tco = _pick_cout_tile(Cout)
    ct = Cout // tco
    kernel = functools.partial(_dense_conv_kernel, KH=KH, KW=KW, dil=dilation, Wp=Wp)
    out = pl.pallas_call(
        kernel,
        out_shape=jax.ShapeDtypeStruct((N, Cout, P), x.dtype),
        grid_spec=pltpu.PrefetchScalarGridSpec(
            num_scalar_prefetch=0,
            grid=(N, ct),
            in_specs=[
                pl.BlockSpec((1, Cp, P), lambda n, j: (n, 0, 0)),
                pl.BlockSpec((tco, K), lambda n, j: (j, 0)),
            ],
            out_specs=pl.BlockSpec((1, tco, P), lambda n, j: (n, j, 0)),
            scratch_shapes=[pltpu.VMEM((K, P), x.dtype)],
        ),
        compiler_params=pltpu.CompilerParams(
            dimension_semantics=("parallel", "parallel"),
            vmem_limit_bytes=_VMEM_LIMIT_BYTES),
    )(xf, w2)
    return _crop_output(out, Cout, Hp, Wp, Ho, Wo)


@functools.partial(jax.jit, static_argnames=("padding", "dilation"))
def depthwise_conv2d_nchw(x, w_oihw, *, padding=0, dilation=1):
    """Depthwise 2D convolution (groups=Cin, multiplier 1, stride=1, no bias) via Pallas."""
    N, C, H, W = x.shape
    Cout, one, KH, KW = w_oihw.shape
    assert Cout == C and one == 1
    Ho = H + 2 * padding - dilation * (KH - 1)
    Wo = W + 2 * padding - dilation * (KW - 1)
    xf, Cp, Hp, Wp, P = _pad_flatten_nchw(x, padding)
    wdw = jnp.pad(w_oihw[:, 0].reshape(C, KH * KW), ((0, Cp - C), (0, 0)))

    kernel = functools.partial(_depthwise_conv_kernel, KH=KH, KW=KW, dil=dilation, Wp=Wp)
    out = pl.pallas_call(
        kernel,
        out_shape=jax.ShapeDtypeStruct((N, Cp, P), x.dtype),
        grid_spec=pltpu.PrefetchScalarGridSpec(
            num_scalar_prefetch=0,
            grid=(N,),
            in_specs=[
                pl.BlockSpec((1, Cp, P), lambda n: (n, 0, 0)),
                pl.BlockSpec((Cp, KH * KW), lambda n: (0, 0)),
            ],
            out_specs=pl.BlockSpec((1, Cp, P), lambda n: (n, 0, 0)),
        ),
        compiler_params=pltpu.CompilerParams(
            dimension_semantics=("parallel",),
            vmem_limit_bytes=_VMEM_LIMIT_BYTES),
    )(xf, wdw)
    return _crop_output(out, C, Hp, Wp, Ho, Wo)


@functools.partial(jax.jit, static_argnames=("padding", "dilation"))
def depthwise_separable_conv2d_nchw(x, w_dw, w_pw, *, padding=0, dilation=1):
    """Fused depthwise + 1x1 pointwise convolution (single pallas_call)."""
    N, C, H, W = x.shape
    Cdw, one, KH, KW = w_dw.shape
    assert Cdw == C and one == 1
    Cout = w_pw.shape[0]
    assert w_pw.shape[1] == C and w_pw.shape[2] == 1 and w_pw.shape[3] == 1
    Ho = H + 2 * padding - dilation * (KH - 1)
    Wo = W + 2 * padding - dilation * (KW - 1)
    xf, Cp, Hp, Wp, P = _pad_flatten_nchw(x, padding)
    wdw = jnp.pad(w_dw[:, 0].reshape(C, KH * KW), ((0, Cp - C), (0, 0)))
    wpw = jnp.pad(w_pw[:, :, 0, 0], ((0, 0), (0, Cp - C)))

    kernel = functools.partial(_dwsep_conv_kernel, KH=KH, KW=KW, dil=dilation, Wp=Wp)
    out = pl.pallas_call(
        kernel,
        out_shape=jax.ShapeDtypeStruct((N, Cout, P), x.dtype),
        grid_spec=pltpu.PrefetchScalarGridSpec(
            num_scalar_prefetch=0,
            grid=(N,),
            in_specs=[
                pl.BlockSpec((1, Cp, P), lambda n: (n, 0, 0)),
                pl.BlockSpec((Cp, KH * KW), lambda n: (0, 0)),
                pl.BlockSpec((Cout, Cp), lambda n: (0, 0)),
            ],
            out_specs=pl.BlockSpec((1, Cout, P), lambda n: (n, 0, 0)),
        ),
        compiler_params=pltpu.CompilerParams(
            dimension_semantics=("parallel",),
            vmem_limit_bytes=_VMEM_LIMIT_BYTES),
    )(xf, wdw, wpw)
    return _crop_output(out, Cout, Hp, Wp, Ho, Wo)


# ----------------------------------------------------------------------------- module port
class WyConv2dPallas:
    """Forward-only JAX/Pallas port of woolly's WyConv2d (NCHW in, NCHW out)."""

    def __init__(self, key, in_channels, out_channels, kernel_size=3, padding=1,
                 strides=1, dilation=1, ctype="vanila", bias=False):
        if strides != 1:
            raise NotImplementedError("stride > 1")   # TODO(synk): strided conv
        if bias:
            raise NotImplementedError("bias=True")    # TODO(synk): bias add
        self.ctype = ctype
        self.padding = padding
        self.dilation = dilation
        ks = kernel_size
        k1, k2 = jax.random.split(key)
        if ctype == "vanila":
            fan_in = in_channels * ks * ks
            self.w = jax.random.normal(k1, (out_channels, in_channels, ks, ks),
                                       jnp.float32) / np.sqrt(fan_in)
            self.w_pw = None
        elif ctype == "depthwise":
            if out_channels != in_channels:
                # TODO(synk): depthwise channel multiplier > 1 not implemented
                raise NotImplementedError("depthwise with out_channels != in_channels")
            self.w = jax.random.normal(k1, (out_channels, 1, ks, ks),
                                       jnp.float32) / np.sqrt(ks * ks)
            self.w_pw = None
        elif ctype == "depthwise_seperable":
            self.w = jax.random.normal(k1, (in_channels, 1, ks, ks),
                                       jnp.float32) / np.sqrt(ks * ks)
            self.w_pw = jax.random.normal(k2, (out_channels, in_channels, 1, 1),
                                          jnp.float32) / np.sqrt(in_channels)
        else:
            raise ValueError(f"unknown ctype {ctype}")

    def __call__(self, x_nchw):
        if self.ctype == "vanila":
            return conv2d_nchw(x_nchw, self.w,
                               padding=self.padding, dilation=self.dilation)
        if self.ctype == "depthwise":
            return depthwise_conv2d_nchw(x_nchw, self.w,
                                         padding=self.padding, dilation=self.dilation)
        return depthwise_separable_conv2d_nchw(x_nchw, self.w, self.w_pw,
                                               padding=self.padding, dilation=self.dilation)


# ----------------------------------------------------------------------------- reference
def _ref_forward(mod, x_nchw):
    def conv(x, w, padding, dilation, groups):
        return jax.lax.conv_general_dilated(
            x, w, window_strides=(1, 1),
            padding=[(padding, padding), (padding, padding)],
            rhs_dilation=(dilation, dilation),
            dimension_numbers=("NCHW", "OIHW", "NCHW"),
            feature_group_count=groups)

    if mod.ctype == "vanila":
        return conv(x_nchw, mod.w, mod.padding, mod.dilation, 1)
    elif mod.ctype == "depthwise":
        return conv(x_nchw, mod.w, mod.padding, mod.dilation, x_nchw.shape[1])
    else:
        y = conv(x_nchw, mod.w, mod.padding, mod.dilation, x_nchw.shape[1])
        return conv(y, mod.w_pw, 0, 1, 1)


if __name__ == "__main__":
    key = jax.random.PRNGKey(0)
    kx, kx2, k1, k2, k3, k4 = jax.random.split(key, 6)
    # Same NCHW convention as the PyTorch module.
    x = jax.random.normal(kx, (2, 4, 16, 16), jnp.float32)
    x2 = jax.random.normal(kx2, (2, 8, 16, 16), jnp.float32)

    cases = [
        (WyConv2dPallas(k1, in_channels=4, out_channels=8, ctype="vanila"), x),
        (WyConv2dPallas(k2, in_channels=4, out_channels=4, ctype="depthwise"), x),
        (WyConv2dPallas(k3, in_channels=4, out_channels=8, ctype="depthwise_seperable"), x),
        (WyConv2dPallas(k4, in_channels=8, out_channels=16, padding=2, dilation=2,
                        ctype="vanila"), x2),
    ]

    for mod, xin in cases:
        out = jax.block_until_ready(mod(xin))
        ref = jax.block_until_ready(_ref_forward(mod, xin))
        assert out.shape == ref.shape, (mod.ctype, out.shape, ref.shape)
        np.testing.assert_allclose(np.asarray(out), np.asarray(ref), rtol=5e-4, atol=5e-4)

    print("KERNEL_OK")
</pallas_src>

<mosaic_0001>
module attributes {stable_mosaic.version = 11 : i64} {
  func.func @_dense_conv_kernel(%arg0: i32, %arg1: i32, %arg2: memref<1x8x384xf32, #tpu.memory_space<vmem>>, %arg3: memref<8x72xf32, #tpu.memory_space<vmem>>, %arg4: memref<1x8x384xf32, #tpu.memory_space<vmem>>, %arg5: memref<72x384xf32, #tpu.memory_space<vmem>>) attributes {dimension_semantics = [#tpu.dimension_semantics<parallel>, #tpu.dimension_semantics<parallel>], iteration_bounds = array<i64: 2, 1>, scalar_prefetch = 0 : i64, scratch_operands = 1 : i64, tpu.core_type = #tpu.core_type<tc>, window_params = [{transform_indices = @transform_0, window_bounds = array<i64: 1, 8, 384>}, {transform_indices = @transform_1, window_bounds = array<i64: 8, 72>}, {transform_indices = @transform_2, window_bounds = array<i64: 1, 8, 384>}]} {
    %c0 = arith.constant 0 : index
    %c0_0 = arith.constant 0 : index
    %c0_1 = arith.constant 0 : index
    %0 = vector.load %arg2[%c0, %c0_0, %c0_1] : memref<1x8x384xf32, #tpu.memory_space<vmem>>, vector<1x8x384xf32>
    %1 = vector.shape_cast %0 : vector<1x8x384xf32> to vector<8x384xf32>
    %c0_2 = arith.constant 0 : index
    %c0_3 = arith.constant 0 : index
    %2 = vector.load %arg5[%c0_2, %c0_3] : memref<72x384xf32, #tpu.memory_space<vmem>>, vector<8x384xf32>
    tpu.vector_store %arg5[%c0_2, %c0_3], %1 {strides = array<i32>} : memref<72x384xf32, #tpu.memory_space<vmem>>, vector<8x384xf32>,
    %c383_i32 = arith.constant 383 : i32
    %3 = tpu.dynamic_rotate %1 by %c383_i32 dim 1 : vector<8x384xf32>, i32 -> vector<8x384xf32>
    %c8 = arith.constant 8 : index
    %c0_4 = arith.constant 0 : index
    %4 = vector.load %arg5[%c8, %c0_4] : memref<72x384xf32, #tpu.memory_space<vmem>>, vector<8x384xf32>
    tpu.vector_store %arg5[%c8, %c0_4], %3 {strides = array<i32>} : memref<72x384xf32, #tpu.memory_space<vmem>>, vector<8x384xf32>,
    %c382_i32 = arith.constant 382 : i32
    %5 = tpu.dynamic_rotate %1 by %c382_i32 dim 1 : vector<8x384xf32>, i32 -> vector<8x384xf32>
    %c16 = arith.constant 16 : index
    %c0_5 = arith.constant 0 : index
    %6 = vector.load %arg5[%c16, %c0_5] : memref<72x384xf32, #tpu.memory_space<vmem>>, vector<8x384xf32>
    tpu.vector_store %arg5[%c16, %c0_5], %5 {strides = array<i32>} : memref<72x384xf32, #tpu.memory_space<vmem>>, vector<8x384xf32>,
    %c366_i32 = arith.constant 366 : i32
    %7 = tpu.dynamic_rotate %1 by %c366_i32 dim 1 : vector<8x384xf32>, i32 -> vector<8x384xf32>
    %c24 = arith.constant 24 : index
    %c0_6 = arith.constant 0 : index
    %8 = vector.load %arg5[%c24, %c0_6] : memref<72x384xf32, #tpu.memory_space<vmem>>, vector<8x384xf32>
    tpu.vector_store %arg5[%c24, %c0_6], %7 {strides = array<i32>} : memref<72x384xf32, #tpu.memory_space<vmem>>, vector<8x384xf32>,
    %c365_i32 = arith.constant 365 : i32
    %9 = tpu.dynamic_rotate %1 by %c365_i32 dim 1 : vector<8x384xf32>, i32 -> vector<8x384xf32>
    %c32 = arith.constant 32 : index
    %c0_7 = arith.constant 0 : index
    %10 = vector.load %arg5[%c32, %c0_7] : memref<72x384xf32, #tpu.memory_space<vmem>>, vector<8x384xf32>
    tpu.vector_store %arg5[%c32, %c0_7], %9 {strides = array<i32>} : memref<72x384xf32, #tpu.memory_space<vmem>>, vector<8x384xf32>,
    %c364_i32 = arith.constant 364 : i32
    %11 = tpu.dynamic_rotate %1 by %c364_i32 dim 1 : vector<8x384xf32>, i32 -> vector<8x384xf32>
    %c40 = arith.constant 40 : index
    %c0_8 = arith.constant 0 : index
    %12 = vector.load %arg5[%c40, %c0_8] : memref<72x384xf32, #tpu.memory_space<vmem>>, vector<8x384xf32>
    tpu.vector_store %arg5[%c40, %c0_8], %11 {strides = array<i32>} : memref<72x384xf32, #tpu.memory_space<vmem>>, vector<8x384xf32>,
    %c348_i32 = arith.constant 348 : i32
    %13 = tpu.dynamic_rotate %1 by %c348_i32 dim 1 : vector<8x384xf32>, i32 -> vector<8x384xf32>
    %c48 = arith.constant 48 : index
    %c0_9 = arith.constant 0 : index
    %14 = vector.load %arg5[%c48, %c0_9] : memref<72x384xf32, #tpu.memory_space<vmem>>, vector<8x384xf32>
    tpu.vector_store %arg5[%c48, %c0_9], %13 {strides = array<i32>} : memref<72x384xf32, #tpu.memory_space<vmem>>, vector<8x384xf32>,
    %c347_i32 = arith.constant 347 : i32
    %15 = tpu.dynamic_rotate %1 by %c347_i32 dim 1 : vector<8x384xf32>, i32 -> vector<8x384xf32>
    %c56 = arith.constant 56 : index
    %c0_10 = arith.constant 0 : index
    %16 = vector.load %arg5[%c56, %c0_10] : memref<72x384xf32, #tpu.memory_space<vmem>>, vector<8x384xf32>
    tpu.vector_store %arg5[%c56, %c0_10], %15 {strides = array<i32>} : memref<72x384xf32, #tpu.memory_space<vmem>>, vector<8x384xf32>,
    %c346_i32 = arith.constant 346 : i32
    %17 = tpu.dynamic_rotate %1 by %c346_i32 dim 1 : vector<8x384xf32>, i32 -> vector<8x384xf32>
    %c64 = arith.constant 64 : index
    %c0_11 = arith.constant 0 : index
    %18 = vector.load %arg5[%c64, %c0_11] : memref<72x384xf32, #tpu.memory_space<vmem>>, vector<8x384xf32>
    tpu.vector_store %arg5[%c64, %c0_11], %17 {strides = array<i32>} : memref<72x384xf32, #tpu.memory_space<vmem>>, vector<8x384xf32>,
    %c0_12 = arith.constant 0 : index
    %c0_13 = arith.constant 0 : index
    %19 = vector.load %arg3[%c0_12, %c0_13] : memref<8x72xf32, #tpu.memory_space<vmem>>, vector<8x72xf32>
    %c0_14 = arith.constant 0 : index
    %c0_15 = arith.constant 0 : index
    %20 = vector.load %arg5[%c0_14, %c0_15] : memref<72x384xf32, #tpu.memory_space<vmem>>, vector<72x384xf32>
    %cst = arith.constant dense<0.000000e+00> : vector<8x384xf32>
    %21 = tpu.matmul %19, %20, %cst {dimension_numbers = #tpu.dot_dimension_numbers<[1], [0], [0], [1], [0, 0, 1, 1], [], []>} : vector<8x72xf32>, vector<72x384xf32>, vector<8x384xf32> -> vector<8x384xf32>
    %c0_16 = arith.constant 0 : index
    %c0_17 = arith.constant 0 : index
    %c0_18 = arith.constant 0 : index
    %22 = vector.load %arg4[%c0_16, %c0_17, %c0_18] : memref<1x8x384xf32, #tpu.memory_space<vmem>>, vector<1x8x384xf32>
    %23 = vector.shape_cast %22 : vector<1x8x384xf32> to vector<8x384xf32>
    %24 = vector.shape_cast %21 : vector<8x384xf32> to vector<1x8x384xf32>
    tpu.vector_store %arg4[%c0_16, %c0_17, %c0_18], %24 {strides = array<i32>} : memref<1x8x384xf32, #tpu.memory_space<vmem>>, vector<1x8x384xf32>,
    return
  }
  func.func @transform_0(%arg0: i32, %arg1: i32) -> (i32, i32, i32) {
    %c0_i32 = arith.constant 0 : i32
    %c0_i32_0 = arith.constant 0 : i32
    %c0_i32_1 = arith.constant 0 : i32
    return %arg0, %c0_i32, %c0_i32_0 : i32, i32, i32
  }
  func.func @transform_1(%arg0: i32, %arg1: i32) -> (i32, i32) {
    %c0_i32 = arith.constant 0 : i32
    %c0_i32_0 = arith.constant 0 : i32
    return %arg1, %c0_i32 : i32, i32
  }
  func.func @transform_2(%arg0: i32, %arg1: i32) -> (i32, i32, i32) {
    %c0_i32 = arith.constant 0 : i32
    %c0_i32_0 = arith.constant 0 : i32
    return %arg0, %arg1, %c0_i32 : i32, i32, i32
  }
}

</mosaic_0001>

<llo_original>
// kernel: conv2d_nchw.1
$region0: #{conv2d_nchw.1}
  #allocation0 [shape = 'u32[]', space=smem, size = 0x4, offset = 0x4, fixed_abs, tag = 'smem constant byte address 0x4 - core index']
  #allocation1 [shape = 'u32[72,128]{1,0:T(1,128)}', space=vmem, size = 0x9000, scoped, tag = 'internal scratch']
  #allocation2 [shape = 'f32[72,384]{1,0:T(8,128)}', space=vmem, size = 0x1b000, scoped, tag = 'scratch operand']
  %s0 = inlined_call_operand.vmem [shape: f32[2,8,384], index: 0, kind: input, shape index: {}]
  %s1 = inlined_call_operand.vmem [shape: f32[8,72], index: 1, kind: input, shape index: {}]
  %s2 = inlined_call_operand.vmem [shape: f32[2,8,384], index: 2, kind: output, shape index: {}]
  %s3 = sld [smem:[#allocation0]]
  $region41: #{conv2d_nchw.1} parent=0
    _
  %s5 = ssub.s32 1, %s3
  %s6 = scalar_select 0, %s5, %s3
  loop: start=0, step=1, limit=4
  $region2: #{conv2d_nchw.1} parent=0 // loop_pre_header
    _
  $region3: #{conv2d_nchw.1} parent=0 // loop_header
    %s8 = sphi 0, %s12
    %p9 = scmp.ge.s32.totalorder %s8, 4
    %s15 = sphi 0, %s27
    %s16 = sphi 0, %s23
    %s17 = sphi 0, %s15
    %s18 = sphi 0, %s16
    %s19 = sphi 0, %s17
    %s20 = sphi 0, %s18
    %s30 = sphi 0, %s32
    %s33 = sphi 0, %s30
    %s34 = sphi 0, %s33
    %s50 = sphi 0, %s34
    %s56 = sphi 0, %s58
    %s59 = sphi 0, %s56
    %s60 = sphi 0, %s59
    %s76 = sphi 0, %s60
    %s84 = sphi 0, %s86
    %s87 = sphi 0, %s84
    %s88 = sphi 0, %s87
    %s104 = sphi 0, %s88
  $region4: #{conv2d_nchw.1} parent=0 // loop_header_branch
    %11 = sbr.rel (%p9) target = $region8
  $region5: #{conv2d_nchw.1} parent=0 // loop_body
    %s13 = ssub.s32 %s8, 1
    %s14 = ssub.s32 %s8, 2
    %s21 = sadd.s32 1, %s16
    %p22 = scmp.ge.s32.totalorder %s21, 1
    %s23 = scalar_select %p22, 0, %s21
    %s24 = sadd.s32 1, %s15
    %s25 = scalar_select %p22, %s24, %s15
    %p26 = scmp.ge.s32.totalorder %s25, 2
    %s27 = scalar_select %p26, 0, %s25
    %s28 = ssub.s32 %s15, %s27
    %p29 = scmp.eq.s32.totalorder %s28, 0
    %s31 = sadd.s32 %s30, 1
    %s32 = scalar_select %p29, %s30, %s31
    %p35 = pneg %p29
    %p36 = scmp.eq.s32.totalorder %s8, 1
    %p37 = por %p35, %p36
    %p38 = scmp.ne.s32.totalorder %s30, %s33
    %p39 = scmp.eq.s32.totalorder %s8, 0
    %p40 = por %p38, %p39
    %p41 = scmp.ne.s32.totalorder %s30, %s33
    %p42 = scmp.eq.s32.totalorder %s13, 1
    %p43 = por %p41, %p42
    %p44 = scmp.ne.s32.totalorder %s33, %s34
    %p45 = scmp.eq.s32.totalorder %s13, 0
    %p46 = por %p44, %p45
    %p47 = scmp.ne.s32.totalorder %s33, %s34
    %p48 = scmp.eq.s32.totalorder %s14, 1
    %p49 = por %p47, %p48
    %p51 = scmp.ne.s32.totalorder %s34, %s50
    %p52 = scmp.eq.s32.totalorder %s14, 0
    %p53 = por %p51, %p52
    %s54 = ssub.s32 %s16, %s23
    %p55 = scmp.eq.s32.totalorder %s54, 0
    %s57 = sadd.s32 %s56, 1
    %s58 = scalar_select %p55, %s56, %s57
    %p61 = pneg %p55
    %p62 = scmp.eq.s32.totalorder %s8, 1
    %p63 = por %p61, %p62
    %p64 = scmp.ne.s32.totalorder %s56, %s59
    %p65 = scmp.eq.s32.totalorder %s8, 0
    %p66 = por %p64, %p65
    %p67 = scmp.ne.s32.totalorder %s56, %s59
    %p68 = scmp.eq.s32.totalorder %s13, 1
    %p69 = por %p67, %p68
    %p70 = scmp.ne.s32.totalorder %s59, %s60
    %p71 = scmp.eq.s32.totalorder %s13, 0
    %p72 = por %p70, %p71
    %p73 = scmp.ne.s32.totalorder %s59, %s60
    %p74 = scmp.eq.s32.totalorder %s14, 1
    %p75 = por %p73, %p74
    %p77 = scmp.ne.s32.totalorder %s60, %s76
    %p78 = scmp.eq.s32.totalorder %s14, 0
    %p79 = por %p77, %p78
    %s80 = ssub.s32 %s15, %s27
    %s81 = ssub.s32 %s16, %s23
    %s82 = sor.u32 %s80, %s81
    %p83 = scmp.eq.s32.totalorder %s82, 0
    %s85 = sadd.s32 %s84, 1
    %s86 = scalar_select %p83, %s84, %s85
    %p89 = pneg %p83
    %p90 = scmp.eq.s32.totalorder %s8, 1
    %p91 = por %p89, %p90
    %p92 = scmp.ne.s32.totalorder %s84, %s87
    %p93 = scmp.eq.s32.totalorder %s8, 0
    %p94 = por %p92, %p93
    %p95 = scmp.ne.s32.totalorder %s84, %s87
    %p96 = scmp.eq.s32.totalorder %s13, 1
    %p97 = por %p95, %p96
    %p98 = scmp.ne.s32.totalorder %s87, %s88
    %p99 = scmp.eq.s32.totalorder %s13, 0
    %p100 = por %p98, %p99
    %p101 = scmp.ne.s32.totalorder %s87, %s88
    %p102 = scmp.eq.s32.totalorder %s14, 1
    %p103 = por %p101, %p102
    %p105 = scmp.ne.s32.totalorder %s88, %s104
    %p106 = scmp.eq.s32.totalorder %s14, 0
    %p107 = por %p105, %p106
    %p108 = scmp.le.s32.totalorder 1, %s8
    %p109 = scmp.lt.s32.totalorder %s8, 3
    %p110 = pnand %p108, %p109
    %p111 = pneg %p110
    // Predicated region
    $region9: #{conv2d_nchw.1} parent=5 // pred_check
      _
    $region10: #{conv2d_nchw.1} parent=5 // pred_check_branch
      %113 = sbr.rel (%p110) target = $region12
    $region11: #{conv2d_nchw.1} parent=5 // pred_region
      %s114 = ssub.s32 %s8, 1
      // Predicated region
      $region13: #{conv2d_nchw.1} parent=11 // pred_check
        %p115 = pneg %p72
      $region14: #{conv2d_nchw.1} parent=11 // pred_check_branch
        %117 = sbr.rel (%p115) target = $region16
      $region15: #{conv2d_nchw.1} parent=11 // pred_region
        %p118 = scmp.lt.s32.totalorder %s18, 0
        %s119 = scalar_select %p118, %s18, 0
        %s120 = smul.addr %s119, 8
        %s121 = scalar_lea.vmem %s1, %s120
      $region16: #{conv2d_nchw.1} parent=11 // pred_fallthru
        _
    $region12: #{conv2d_nchw.1} parent=5 // pred_fallthru
      _
    %p122 = scmp.lt.s32.totalorder %s8, 2
    // Predicated region
    $region17: #{conv2d_nchw.1} parent=5 // pred_check
      %p123 = pneg %p122
    $region18: #{conv2d_nchw.1} parent=5 // pred_check_branch
      %125 = sbr.rel (%p123) target = $region20
    $region19: #{conv2d_nchw.1} parent=5 // pred_region
      // Predicated region
      $region21: #{conv2d_nchw.1} parent=19 // pred_check
        %p126 = pneg %p40
      $region22: #{conv2d_nchw.1} parent=19 // pred_check_branch
        %128 = sbr.rel (%p126) target = $region24
      $region23: #{conv2d_nchw.1} parent=19 // pred_region
        %p129 = scmp.lt.s32.totalorder %s15, 1
        %s130 = scalar_select %p129, %s15, 1
        %s131 = smul.addr %s130, 3
        %s132 = smul.addr %s131, 8
        %s133 = scalar_lea.vmem %s0, %s132
      $region24: #{conv2d_nchw.1} parent=19 // pred_fallthru
        _
    $region20: #{conv2d_nchw.1} parent=5 // pred_fallthru
      _
    %p134 = scmp.le.s32.totalorder 1, %s8
    %p135 = scmp.lt.s32.totalorder %s8, 3
    %p136 = pnand %p134, %p135
    %p137 = pneg %p136
    // Predicated region
    $region25: #{conv2d_nchw.1} parent=5 // pred_check
      _
    $region26: #{conv2d_nchw.1} parent=5 // pred_check_branch
      %139 = sbr.rel (%p136) target = $region28
    $region27: #{conv2d_nchw.1} parent=5 // pred_region
      %s140 = ssub.s32 %s8, 1
      %p141 = scmp.lt.s32.totalorder %s17, 1
      %s142 = scalar_select %p141, %s17, 1
      %s143 = smul.addr %s142, 3
      %s144 = smul.addr %s143, 8
      %s145 = scalar_lea.vmem %s0, %s144
      %p146 = pneg %p46
      %p147 = pneg %p43
      %p148 = scmp.lt.s32.totalorder %s18, 0
      %s149 = scalar_select %p148, %s18, 0
      %s150 = smul.addr %s149, 8
      %s151 = scalar_lea.vmem %s1, %s150
      %p152 = pneg %p72
      %p153 = pneg %p69
      %p154 = pneg %p100
      %p155 = pneg %p97
      %p156 = scmp.lt.s32.totalorder %s17, 1
      %s157 = scalar_select %p156, %s17, 1
      %p158 = scmp.lt.s32.totalorder %s18, 0
      %s159 = scalar_select %p158, %s18, 0
      %s160 = smul.addr %s159, 3
      %s161 = smul.addr %s157, 3
      %s162 = sadd.s32 %s160, %s161
      %s163 = smul.addr %s162, 8
      %s164 = scalar_lea.vmem %s2, %s163
      %p165 = scmp.lt.s32.totalorder %s17, 1
      %s166 = scalar_select %p165, %s17, 1
      %s167 = smul.addr %s166, 3
      %s168 = smul.addr %s167, 8
      %s169 = scalar_lea.vmem %s0, %s168
      %p170 = scmp.lt.s32.totalorder %s18, 0
      %s171 = scalar_select %p170, %s18, 0
      %s172 = smul.addr %s171, 8
      %s173 = scalar_lea.vmem %s1, %s172
      %p174 = scmp.lt.s32.totalorder %s17, 1
      %s175 = scalar_select %p174, %s17, 1
      %p176 = scmp.lt.s32.totalorder %s18, 0
      %s177 = scalar_select %p176, %s18, 0
      %s178 = smul.addr %s177, 3
      %s179 = smul.addr %s175, 3
      %s180 = sadd.s32 %s178, %s179
      %s181 = smul.addr %s180, 8
      %s182 = scalar_lea.vmem %s2, %s181
      %v183 = vld [vmem:[%s169] sm:$0xff]
      %v184 = vld [vmem:[%s169 + $0x8] sm:$0xff]
      %v185 = vld [vmem:[%s169 + $0x10] sm:$0xff]
      %186 = vst [vmem:[#allocation2] sm:$0xff] %v183
      %187 = vst [vmem:[#allocation2 + $0x8] sm:$0xff] %v184
      %188 = vst [vmem:[#allocation2 + $0x10] sm:$0xff] %v185
      %189 = vrot.lane.b32.xlu0 %v183, 127
      %v190 = vpop.permute.xlu0 %189
      %191 = vrot.lane.b32.xlu0 %v184, 127
      %v192 = vpop.permute.xlu0 %191
      %193 = vrot.lane.b32.xlu0 %v185, 127
      %v194 = vpop.permute.xlu0 %193
      %v195 = vlaneseq
      %v196 = vand.u32 %v195, 127
      %vm197 = vcmp.lt.s32.totalorder %v196, 127
      %v198 = vsel %vm197, %v192, %v194
      %v199 = vsel %vm197, %v190, %v192
      %v200 = vsel %vm197, %v194, %v190
      %201 = vst [vmem:[#allocation2 + $0x18] sm:$0xff] %v199
      %202 = vst [vmem:[#allocation2 + $0x20] sm:$0xff] %v198
      %203 = vst [vmem:[#allocation2 + $0x28] sm:$0xff] %v200
      %204 = vrot.lane.b32.xlu0 %v183, 126
      %v205 = vpop.permute.xlu0 %204
      %206 = vrot.lane.b32.xlu0 %v184, 126
      %v207 = vpop.permute.xlu0 %206
      %208 = vrot.lane.b32.xlu0 %v185, 126
      %v209 = vpop.permute.xlu0 %208
      %vm210 = vcmp.lt.s32.totalorder %v196, 126
      %v211 = vsel %vm210, %v207, %v209
      %v212 = vsel %vm210, %v205, %v207
      %v213 = vsel %vm210, %v209, %v205
      %214 = vst [vmem:[#allocation2 + $0x30] sm:$0xff] %v212
      %215 = vst [vmem:[#allocation2 + $0x38] sm:$0xff] %v211
      %216 = vst [vmem:[#allocation2 + $0x40] sm:$0xff] %v213
      %217 = vrot.lane.b32.xlu0 %v183, 110
      %v218 = vpop.permute.xlu0 %217
      %219 = vrot.lane.b32.xlu0 %v184, 110
      %v220 = vpop.permute.xlu0 %219
      %221 = vrot.lane.b32.xlu0 %v185, 110
      %v222 = vpop.permute.xlu0 %221
      %vm223 = vcmp.lt.s32.totalorder %v196, 110
      %v224 = vsel %vm223, %v220, %v222
      %v225 = vsel %vm223, %v218, %v220
      %v226 = vsel %vm223, %v222, %v218
      %227 = vst [vmem:[#allocation2 + $0x48] sm:$0xff] %v225
      %228 = vst [vmem:[#allocation2 + $0x50] sm:$0xff] %v224
      %229 = vst [vmem:[#allocation2 + $0x58] sm:$0xff] %v226
      %230 = vrot.lane.b32.xlu0 %v183, 109
      %v231 = vpop.permute.xlu0 %230
      %232 = vrot.lane.b32.xlu0 %v184, 109
      %v233 = vpop.permute.xlu0 %232
      %234 = vrot.lane.b32.xlu0 %v185, 109
      %v235 = vpop.permute.xlu0 %234
      %vm236 = vcmp.lt.s32.totalorder %v196, 109
      %v237 = vsel %vm236, %v233, %v235
      %v238 = vsel %vm236, %v231, %v233
      %v239 = vsel %vm236, %v235, %v231
      %240 = vst [vmem:[#allocation2 + $0x60] sm:$0xff] %v238
      %241 = vst [vmem:[#allocation2 + $0x68] sm:$0xff] %v237
      %242 = vst [vmem:[#allocation2 + $0x70] sm:$0xff] %v239
      %243 = vrot.lane.b32.xlu0 %v183, 108
      %v244 = vpop.permute.xlu0 %243
      %245 = vrot.lane.b32.xlu0 %v184, 108
      %v246 = vpop.permute.xlu0 %245
      %247 = vrot.lane.b32.xlu0 %v185, 108
      %v248 = vpop.permute.xlu0 %247
      %vm249 = vcmp.lt.s32.totalorder %v196, 108
      %v250 = vsel %vm249, %v246, %v248
      %v251 = vsel %vm249, %v244, %v246
      %v252 = vsel %vm249, %v248, %v244
      %253 = vst [vmem:[#allocation2 + $0x78] sm:$0xff] %v251
      %254 = vst [vmem:[#allocation2 + $0x80] sm:$0xff] %v250
      %255 = vst [vmem:[#allocation2 + $0x88] sm:$0xff] %v252
      %256 = vrot.lane.b32.xlu0 %v183, 92
      %v257 = vpop.permute.xlu0 %256
      %258 = vrot.lane.b32.xlu0 %v184, 92
      %v259 = vpop.permute.xlu0 %258
      %260 = vrot.lane.b32.xlu0 %v185, 92
      %v261 = vpop.permute.xlu0 %260
      %vm262 = vcmp.lt.s32.totalorder %v196, 92
      %v263 = vsel %vm262, %v259, %v261
      %v264 = vsel %vm262, %v257, %v259
      %v265 = vsel %vm262, %v261, %v257
      %266 = vst [vmem:[#allocation2 + $0x90] sm:$0xff] %v264
      %267 = vst [vmem:[#allocation2 + $0x98] sm:$0xff] %v263
      %268 = vst [vmem:[#allocation2 + $0xa0] sm:$0xff] %v265
      %269 = vrot.lane.b32.xlu0 %v183, 91
      %v270 = vpop.permute.xlu0 %269
      %271 = vrot.lane.b32.xlu0 %v184, 91
      %v272 = vpop.permute.xlu0 %271
      %273 = vrot.lane.b32.xlu0 %v185, 91
      %v274 = vpop.permute.xlu0 %273
      %vm275 = vcmp.lt.s32.totalorder %v196, 91
      %v276 = vsel %vm275, %v272, %v274
      %v277 = vsel %vm275, %v270, %v272
      %v278 = vsel %vm275, %v274, %v270
      %279 = vst [vmem:[#allocation2 + $0xa8] sm:$0xff] %v277
      %280 = vst [vmem:[#allocation2 + $0xb0] sm:$0xff] %v276
      %281 = vst [vmem:[#allocation2 + $0xb8] sm:$0xff] %v278
      %282 = vrot.lane.b32.xlu0 %v183, 90
      %v283 = vpop.permute.xlu0 %282
      %284 = vrot.lane.b32.xlu0 %v184, 90
      %v285 = vpop.permute.xlu0 %284
      %286 = vrot.lane.b32.xlu0 %v185, 90
      %v287 = vpop.permute.xlu0 %286
      %vm288 = vcmp.lt.s32.totalorder %v196, 90
      %v289 = vsel %vm288, %v285, %v287
      %v290 = vsel %vm288, %v283, %v285
      %v291 = vsel %vm288, %v287, %v283
      %292 = vst [vmem:[#allocation2 + $0xc0] sm:$0xff] %v290
      %293 = vst [vmem:[#allocation2 + $0xc8] sm:$0xff] %v289
      %294 = vst [vmem:[#allocation2 + $0xd0] sm:$0xff] %v291
      %v295 = vld [vmem:[%s173] sm:$0xff]
      %v296 = vld [vmem:[#allocation2] sm:$0xff]
      %v297 = vld [vmem:[#allocation2 + $0x8] sm:$0xff]
      %v298 = vld [vmem:[#allocation2 + $0x10] sm:$0xff]
      %v299 = vld [vmem:[#allocation2 + $0x18] sm:$0xff]
      %v300 = vld [vmem:[#allocation2 + $0x20] sm:$0xff]
      %v301 = vld [vmem:[#allocation2 + $0x28] sm:$0xff]
      %v302 = vld [vmem:[#allocation2 + $0x30] sm:$0xff]
      %v303 = vld [vmem:[#allocation2 + $0x38] sm:$0xff]
      %v304 = vld [vmem:[#allocation2 + $0x40] sm:$0xff]
      %v305 = vld [vmem:[#allocation2 + $0x48] sm:$0xff]
      %v306 = vld [vmem:[#allocation2 + $0x50] sm:$0xff]
      %v307 = vld [vmem:[#allocation2 + $0x58] sm:$0xff]
      %v308 = vld [vmem:[#allocation2 + $0x60] sm:$0xff]
      %v309 = vld [vmem:[#allocation2 + $0x68] sm:$0xff]
      %v310 = vld [vmem:[#allocation2 + $0x70] sm:$0xff]
      %v311 = vld [vmem:[#allocation2 + $0x78] sm:$0xff]
      %v312 = vld [vmem:[#allocation2 + $0x80] sm:$0xff]
      %v313 = vld [vmem:[#allocation2 + $0x88] sm:$0xff]
      %v314 = vld [vmem:[#allocation2 + $0x90] sm:$0xff]
      %v315 = vld [vmem:[#allocation2 + $0x98] sm:$0xff]
      %v316 = vld [vmem:[#allocation2 + $0xa0] sm:$0xff]
      %v317 = vld [vmem:[#allocation2 + $0xa8] sm:$0xff]
      %v318 = vld [vmem:[#allocation2 + $0xb0] sm:$0xff]
      %v319 = vld [vmem:[#allocation2 + $0xb8] sm:$0xff]
      %v320 = vld [vmem:[#allocation2 + $0xc0] sm:$0xff]
      %v321 = vld [vmem:[#allocation2 + $0xc8] sm:$0xff]
      %v322 = vld [vmem:[#allocation2 + $0xd0] sm:$0xff]
      %vm323 = vcmask 588800
      %v325 = vsel %vm323, %v295, 0
      %327 = vmatpush.msra.mxu0 0.0
      %328 = vmatpush.msra.mxu0 0.0
      %329 = vmatpush.msra.mxu0 0.0
      %330 = vmatpush.msra.mxu0 0.0
      %331 = vmatpush.msra.mxu0 0.0
      %332 = vmatpush.msra.mxu0 0.0
      %333 = vmatpush.msra.mxu0 0.0
      %334 = vmatpush.msra.mxu0 %v320
      %335 = vmatpush.msra.mxu0 %v317
      %336 = vmatpush.msra.mxu0 %v314
      %337 = vmatpush.msra.mxu0 %v311
      %338 = vmatpush.msra.mxu0 %v308
      %339 = vmatpush.msra.mxu0 %v305
      %340 = vmatpush.msra.mxu0 %v302
      %341 = vmatpush.msra.mxu0 %v299
      %342 = vmatpush.msra.mxu0 %v296
      %343 = vmatmul.f32.gmra.mxu0 %v325
      %v344 = vpop.f32.mrf.mxu0
      %v345 = vadd.f32 0.0, %v344
      %346 = vdwg.mxu0
      %347 = vmatpush.msra.mxu0 0.0
      %348 = vmatpush.msra.mxu0 0.0
      %349 = vmatpush.msra.mxu0 0.0
      %350 = vmatpush.msra.mxu0 0.0
      %351 = vmatpush.msra.mxu0 0.0
      %352 = vmatpush.msra.mxu0 0.0
      %353 = vmatpush.msra.mxu0 0.0
      %354 = vmatpush.msra.mxu0 %v321
      %355 = vmatpush.msra.mxu0 %v318
      %356 = vmatpush.msra.mxu0 %v315
      %357 = vmatpush.msra.mxu0 %v312
      %358 = vmatpush.msra.mxu0 %v309
      %359 = vmatpush.msra.mxu0 %v306
      %360 = vmatpush.msra.mxu0 %v303
      %361 = vmatpush.msra.mxu0 %v300
      %362 = vmatpush.msra.mxu0 %v297
      %363 = vmatmul.f32.gmra.mxu0 %v325
      %v364 = vpop.f32.mrf.mxu0
      %v365 = vadd.f32 0.0, %v364
      %366 = vdwg.mxu0
      %367 = vmatpush.msra.mxu0 0.0
      %368 = vmatpush.msra.mxu0 0.0
      %369 = vmatpush.msra.mxu0 0.0
      %370 = vmatpush.msra.mxu0 0.0
      %371 = vmatpush.msra.mxu0 0.0
      %372 = vmatpush.msra.mxu0 0.0
      %373 = vmatpush.msra.mxu0 0.0
      %374 = vmatpush.msra.mxu0 %v322
      %375 = vmatpush.msra.mxu0 %v319
      %376 = vmatpush.msra.mxu0 %v316
      %377 = vmatpush.msra.mxu0 %v313
      %378 = vmatpush.msra.mxu0 %v310
      %379 = vmatpush.msra.mxu0 %v307
      %380 = vmatpush.msra.mxu0 %v304
      %381 = vmatpush.msra.mxu0 %v301
      %382 = vmatpush.msra.mxu0 %v298
      %383 = vmatmul.f32.gmra.mxu0 %v325
      %v384 = vpop.f32.mrf.mxu0
      %v385 = vadd.f32 0.0, %v384
      %386 = vdwg.mxu0
      %387 = vst [vmem:[%s182] sm:$0xff] %v345
      %388 = vst [vmem:[%s182 + $0x8] sm:$0xff] %v365
      %389 = vst [vmem:[%s182 + $0x10] sm:$0xff] %v385
      %p390 = scmp.lt.s32.totalorder %s17, 1
      %s391 = scalar_select %p390, %s17, 1
      %p392 = scmp.lt.s32.totalorder %s18, 0
      %s393 = scalar_select %p392, %s18, 0
      %s394 = smul.addr %s393, 3
      %s395 = smul.addr %s391, 3
      %s396 = sadd.s32 %s394, %s395
      %s397 = smul.addr %s396, 8
      %s398 = scalar_lea.vmem %s2, %s397
      // Predicated region
      $region29: #{conv2d_nchw.1} parent=27 // pred_check
        %p399 = pneg %p97
      $region30: #{conv2d_nchw.1} parent=27 // pred_check_branch
        %401 = sbr.rel (%p399) target = $region32
      $region31: #{conv2d_nchw.1} parent=27 // pred_region
        _
      $region32: #{conv2d_nchw.1} parent=27 // pred_fallthru
        _
    $region28: #{conv2d_nchw.1} parent=5 // pred_fallthru
      _
    %p402 = scmp.le.s32.totalorder 2, %s8
    // Predicated region
    $region33: #{conv2d_nchw.1} parent=5 // pred_check
      %p403 = pneg %p402
    $region34: #{conv2d_nchw.1} parent=5 // pred_check_branch
      %405 = sbr.rel (%p403) target = $region36
    $region35: #{conv2d_nchw.1} parent=5 // pred_region
      %s406 = ssub.s32 %s8, 2
      // Predicated region
      $region37: #{conv2d_nchw.1} parent=35 // pred_check
        %p407 = pneg %p103
      $region38: #{conv2d_nchw.1} parent=35 // pred_check_branch
        %409 = sbr.rel (%p407) target = $region40
      $region39: #{conv2d_nchw.1} parent=35 // pred_region
        %p410 = scmp.lt.s32.totalorder %s19, 1
        %s411 = scalar_select %p410, %s19, 1
        %p412 = scmp.lt.s32.totalorder %s20, 0
        %s413 = scalar_select %p412, %s20, 0
        %s414 = smul.addr %s413, 3
        %s415 = smul.addr %s411, 3
        %s416 = sadd.s32 %s414, %s415
        %s417 = smul.addr %s416, 8
        %s418 = scalar_lea.vmem %s2, %s417
      $region40: #{conv2d_nchw.1} parent=35 // pred_fallthru
        _
    $region36: #{conv2d_nchw.1} parent=5 // pred_fallthru
      _
  $region6: #{conv2d_nchw.1} parent=0 // loop_footer
    %s12 = sadd.s32 1, %s8
  $region7: #{conv2d_nchw.1} parent=0 // loop_footer_branch
    %7 = sbr.rel target = $region3
  $region8: #{conv2d_nchw.1} parent=0 // loop_exit
    _

</llo_original>
